<compile_context>
chip_gen: v7x
topology: tpu7x:2x2x1
jax: 0.10.0
libtpu: 0.0.40
codegen_flags: <defaults>
</compile_context>

<pallas_src>
import jax
import jax.numpy as jnp
from jax.experimental import pallas as pl
from jax.experimental.pallas import tpu as pltpu


def _cdiv(a, b):
    return (a + b - 1) // b


def _round_up(x, m):
    return ((x + m - 1) // m) * m


def _choose_tile(dim, max_tile, gran=128):
    """Balanced tile size: full dim if it fits, else ~dim/nb rounded up to `gran`."""
    if dim <= max_tile:
        return dim                      # full-extent block: always layout-legal
    nb = _cdiv(dim, max_tile)
    return _round_up(_cdiv(dim, nb), gran)


def _make_matmul_kernel(nk, k_rem, precision):
    """nk: number of K grid steps. k_rem: valid K length in the last K block (0 => divides evenly)."""

    def kernel(a_ref, b_ref, o_ref):
        k = pl.program_id(2)

        # Output block is resident across the K ("arbitrary", last) grid axis and is
        # float32, so accumulate directly into it.
        @pl.when(k == 0)
        def _():
            o_ref[...] = jnp.zeros_like(o_ref)

        if k_rem == 0:
            o_ref[...] += jnp.dot(
                a_ref[...], b_ref[...],
                preferred_element_type=jnp.float32, precision=precision,
            )
        else:
            @pl.when(k < nk - 1)
            def _():
                o_ref[...] += jnp.dot(
                    a_ref[...], b_ref[...],
                    preferred_element_type=jnp.float32, precision=precision,
                )

            @pl.when(k == nk - 1)
            def _():
                # Final (partial) K block: zero the OOB tail of both operands so the
                # unspecified OOB contents cannot contaminate in-bounds outputs.
                a = a_ref[...]
                b = b_ref[...]
                a_col = jax.lax.broadcasted_iota(jnp.int32, a.shape, 1)
                b_row = jax.lax.broadcasted_iota(jnp.int32, b.shape, 0)
                a = jnp.where(a_col < k_rem, a, 0.0)
                b = jnp.where(b_row < k_rem, b, 0.0)
                o_ref[...] += jnp.dot(
                    a, b, preferred_element_type=jnp.float32, precision=precision,
                )

    return kernel


def matmul_pallas(A, B, *, tm_max=1024, tn_max=1024, tk_max=1024,
                  precision=jax.lax.Precision.HIGHEST):
    """C = A @ B with float32 accumulation (same semantics as matmul_cuda)."""
    M, K = A.shape
    K2, N = B.shape
    assert K == K2, "inner dimensions must match"

    A = A.astype(jnp.float32)
    B = B.astype(jnp.float32)

    # Balanced, MXU-friendly tiles (multiples of 128 when the dim is split).
    tm = _choose_tile(M, tm_max, 128)
    tn = _choose_tile(N, tn_max, 128)
    tk = _choose_tile(K, tk_max, 128)

    gm, gn, gk = _cdiv(M, tm), _cdiv(N, tn), _cdiv(K, tk)
    k_rem = K - (gk - 1) * tk
    if k_rem == tk:
        k_rem = 0  # K divides evenly into tk -> no masking needed

    kernel = _make_matmul_kernel(gk, k_rem, precision)

    cost = pl.CostEstimate(
        flops=2 * M * N * K,
        bytes_accessed=4 * (M * K + K * N + M * N),
        transcendentals=0,
    )

    out = pl.pallas_call(
        kernel,
        out_shape=jax.ShapeDtypeStruct((M, N), jnp.float32),
        grid_spec=pltpu.PrefetchScalarGridSpec(
            num_scalar_prefetch=0,
            grid=(gm, gn, gk),
            in_specs=[
                pl.BlockSpec((tm, tk), lambda i, j, k: (i, k)),
                pl.BlockSpec((tk, tn), lambda i, j, k: (k, j)),
            ],
            out_specs=pl.BlockSpec((tm, tn), lambda i, j, k: (i, j)),
        ),
        compiler_params=pltpu.CompilerParams(
            dimension_semantics=("parallel", "parallel", "arbitrary"),
            # Worst-case live ~24 MiB with 1024-wide tiles; 48 MiB is safe on every
            # generation (v7x physical VMEM = 64 MiB/TC).
            vmem_limit_bytes=48 * 1024 * 1024,
        ),
        cost_estimate=cost,
    )(A, B)

    return out


if __name__ == "__main__":
    key = jax.random.PRNGKey(0)
    k1, k2, k3, k4 = jax.random.split(key, 4)
    hi = jax.lax.Precision.HIGHEST

    # Case 1: small shapes consistent with a generic matmul forward: A (M,K), B (K,N).
    M, K, N = 64, 48, 96
    A = jax.random.normal(k1, (M, K), dtype=jnp.float32)
    B = jax.random.normal(k2, (K, N), dtype=jnp.float32)

    C = matmul_pallas(A, B)
    jax.block_until_ready(C)
    C_ref = jnp.matmul(A, B, precision=hi)
    assert C.shape == (M, N)
    assert jnp.allclose(C, C_ref, atol=1e-3, rtol=1e-3), "mismatch vs reference (small)"

    # Case 2: non-tile-aligned dims, single full-extent block path.
    M2, K2, N2 = 200, 136, 260
    A2 = jax.random.normal(k3, (M2, K2), dtype=jnp.float32)
    B2 = jax.random.normal(k4, (K2, N2), dtype=jnp.float32)
    C2 = matmul_pallas(A2, B2)
    jax.block_until_ready(C2)
    C2_ref = jnp.matmul(A2, B2, precision=hi)
    assert C2.shape == (M2, N2)
    assert jnp.allclose(C2, C2_ref, atol=1e-3, rtol=1e-3), "mismatch vs reference (full-block)"

    # Case 3: same data with small max tiles to exercise ragged M/N edge blocks and
    # the in-kernel K-tail masking path (K=136, tk=128 -> k_rem=8).
    C3 = matmul_pallas(A2, B2, tm_max=128, tn_max=128, tk_max=128)
    jax.block_until_ready(C3)
    assert C3.shape == (M2, N2)
    assert jnp.allclose(C3, C2_ref, atol=1e-3, rtol=1e-3), "mismatch vs reference (ragged tiles)"

    print("KERNEL_OK")
</pallas_src>

<mosaic_0001>
module attributes {stable_mosaic.version = 11 : i64} {
  func.func @kernel(%arg0: i32, %arg1: i32, %arg2: i32, %arg3: memref<64x48xf32, #tpu.memory_space<vmem>>, %arg4: memref<48x96xf32, #tpu.memory_space<vmem>>, %arg5: memref<64x96xf32, #tpu.memory_space<vmem>>) attributes {dimension_semantics = [#tpu.dimension_semantics<parallel>, #tpu.dimension_semantics<parallel>, #tpu.dimension_semantics<arbitrary>], iteration_bounds = array<i64: 1, 1, 1>, scalar_prefetch = 0 : i64, scratch_operands = 0 : i64, tpu.core_type = #tpu.core_type<tc>, window_params = [{transform_indices = @transform_0, window_bounds = array<i64: 64, 48>}, {transform_indices = @transform_1, window_bounds = array<i64: 48, 96>}, {transform_indices = @transform_2, window_bounds = array<i64: 64, 96>}]} {
    %c0_i32 = arith.constant 0 : i32
    %0 = arith.cmpi eq, %arg2, %c0_i32 : i32
    %1 = arith.extui %0 : i1 to i32
    %c0_i32_0 = arith.constant 0 : i32
    %2 = arith.cmpi ne, %1, %c0_i32_0 : i32
    scf.if %2 {
      %cst_8 = arith.constant 0.000000e+00 : f32
      %9 = vector.broadcast %cst_8 : f32 to vector<64x96xf32>
      %c0_9 = arith.constant 0 : index
      %c0_10 = arith.constant 0 : index
      %10 = vector.load %arg5[%c0_9, %c0_10] : memref<64x96xf32, #tpu.memory_space<vmem>>, vector<64x96xf32>
      tpu.vector_store %arg5[%c0_9, %c0_10], %9 {strides = array<i32>} : memref<64x96xf32, #tpu.memory_space<vmem>>, vector<64x96xf32>,
    } else {
    }
    %c0 = arith.constant 0 : index
    %c0_1 = arith.constant 0 : index
    %3 = vector.load %arg5[%c0, %c0_1] : memref<64x96xf32, #tpu.memory_space<vmem>>, vector<64x96xf32>
    %c0_2 = arith.constant 0 : index
    %c0_3 = arith.constant 0 : index
    %4 = vector.load %arg3[%c0_2, %c0_3] : memref<64x48xf32, #tpu.memory_space<vmem>>, vector<64x48xf32>
    %c0_4 = arith.constant 0 : index
    %c0_5 = arith.constant 0 : index
    %5 = vector.load %arg4[%c0_4, %c0_5] : memref<48x96xf32, #tpu.memory_space<vmem>>, vector<48x96xf32>
    %cst = arith.constant dense<0.000000e+00> : vector<64x96xf32>
    %6 = tpu.matmul %4, %5, %cst {dimension_numbers = #tpu.dot_dimension_numbers<[1], [0], [0], [1], [0, 0, 1, 1], [], []>, precision = #tpu.contract_precision<fp32>} : vector<64x48xf32>, vector<48x96xf32>, vector<64x96xf32> -> vector<64x96xf32>
    %7 = arith.addf %3, %6 : vector<64x96xf32>
    %c0_6 = arith.constant 0 : index
    %c0_7 = arith.constant 0 : index
    %8 = vector.load %arg5[%c0_6, %c0_7] : memref<64x96xf32, #tpu.memory_space<vmem>>, vector<64x96xf32>
    tpu.vector_store %arg5[%c0_6, %c0_7], %7 {strides = array<i32>} : memref<64x96xf32, #tpu.memory_space<vmem>>, vector<64x96xf32>,
    return
  }
  func.func @transform_0(%arg0: i32, %arg1: i32, %arg2: i32) -> (i32, i32) {
    %c0_i32 = arith.constant 0 : i32
    return %arg0, %arg2 : i32, i32
  }
  func.func @transform_1(%arg0: i32, %arg1: i32, %arg2: i32) -> (i32, i32) {
    %c0_i32 = arith.constant 0 : i32
    return %arg2, %arg1 : i32, i32
  }
  func.func @transform_2(%arg0: i32, %arg1: i32, %arg2: i32) -> (i32, i32) {
    %c0_i32 = arith.constant 0 : i32
    return %arg0, %arg1 : i32, i32
  }
}

</mosaic_0001>

<llo_original>
// kernel: tpu_custom_call.1
$region0: #{tpu_custom_call.1}
  #allocation0 [shape = 'u32[]', space=smem, size = 0x4, offset = 0x4, fixed_abs, tag = 'smem constant byte address 0x4 - core index']
  #allocation1 [shape = 'u32[144,128]{1,0:T(1,128)}', space=vmem, size = 0x12000, scoped, tag = 'internal scratch']
  %s0 = inlined_call_operand.vmem [shape: f32[64,48], index: 0, kind: input, shape index: {}]
  %s1 = inlined_call_operand.vmem [shape: f32[48,96], index: 1, kind: input, shape index: {}]
  %s2 = inlined_call_operand.hbm [shape: f32[64,96], index: 2, kind: output, shape index: {}]
  %s3 = sld [smem:[#allocation0]]
  $region22: #{tpu_custom_call.1} parent=0
    _
  %s5 = ssub.s32 1, %s3
  %s6 = scalar_select 0, %s5, %s3
  $region1: #{tpu_custom_call.1} parent=0
    #allocation2 [shape = 'u8[32768]{0}', space=vmem, size = 0x8000, scoped, tag = 'output window, operand 0, single buffered']
    #allocation3 [shape = 's32[1]{0}', space=sflag, size = 0x4, scoped, tag = 'scoped memory for tpu_custom_call.1']
    %7 = vsyncpa [#allocation3], 0
    // Predicated region
    $region2: #{tpu_custom_call.1} parent=1 // pred_check
      _
    $region3: #{tpu_custom_call.1} parent=1 // pred_check_branch
      %9 = sbr.rel (0) target = $region5
    $region4: #{tpu_custom_call.1} parent=1 // pred_region
      _
    $region5: #{tpu_custom_call.1} parent=1 // pred_fallthru
      _
    // Predicated region
    $region6: #{tpu_custom_call.1} parent=1 // pred_check
      _
    $region7: #{tpu_custom_call.1} parent=1 // pred_check_branch
      %11 = sbr.rel (0) target = $region9
    $region8: #{tpu_custom_call.1} parent=1 // pred_region
      _
    $region9: #{tpu_custom_call.1} parent=1 // pred_fallthru
      _
    %p12 = scmp.eq.s32.totalorder 0, 0
    // Predicated region
    $region10: #{tpu_custom_call.1} parent=1 // pred_check
      %p13 = pneg %p12
    $region11: #{tpu_custom_call.1} parent=1 // pred_check_branch
      %15 = sbr.rel (%p13) target = $region13
    $region12: #{tpu_custom_call.1} parent=1 // pred_region
      %vm16 = vcmask 785408
      %17 = vst.msk [vmem:[#allocation2] sm:$0xff] %vm16, 0.0
      %18 = vst.msk [vmem:[#allocation2 + $0x8] sm:$0xff] %vm16, 0.0
      %19 = vst.msk [vmem:[#allocation2 + $0x10] sm:$0xff] %vm16, 0.0
      %20 = vst.msk [vmem:[#allocation2 + $0x18] sm:$0xff] %vm16, 0.0
      %21 = vst.msk [vmem:[#allocation2 + $0x20] sm:$0xff] %vm16, 0.0
      %22 = vst.msk [vmem:[#allocation2 + $0x28] sm:$0xff] %vm16, 0.0
      %23 = vst.msk [vmem:[#allocation2 + $0x30] sm:$0xff] %vm16, 0.0
      %24 = vst.msk [vmem:[#allocation2 + $0x38] sm:$0xff] %vm16, 0.0
    $region13: #{tpu_custom_call.1} parent=1 // pred_fallthru
      _
    %v25 = vld [vmem:[#allocation2] sm:$0xff]
    %v26 = vld [vmem:[#allocation2 + $0x8] sm:$0xff]
    %v27 = vld [vmem:[#allocation2 + $0x10] sm:$0xff]
    %v28 = vld [vmem:[#allocation2 + $0x18] sm:$0xff]
    %v29 = vld [vmem:[#allocation2 + $0x20] sm:$0xff]
    %v30 = vld [vmem:[#allocation2 + $0x28] sm:$0xff]
    %v31 = vld [vmem:[#allocation2 + $0x30] sm:$0xff]
    %v32 = vld [vmem:[#allocation2 + $0x38] sm:$0xff]
    %v33 = vld [vmem:[%s0] sm:$0xff]
    %v34 = vld [vmem:[%s0 + $0x8] sm:$0xff]
    %v35 = vld [vmem:[%s0 + $0x10] sm:$0xff]
    %v36 = vld [vmem:[%s0 + $0x18] sm:$0xff]
    %v37 = vld [vmem:[%s0 + $0x20] sm:$0xff]
    %v38 = vld [vmem:[%s0 + $0x28] sm:$0xff]
    %v39 = vld [vmem:[%s0 + $0x30] sm:$0xff]
    %v40 = vld [vmem:[%s0 + $0x38] sm:$0xff]
    %v41 = vld [vmem:[%s1] sm:$0xff]
    %v42 = vld [vmem:[%s1 + $0x8] sm:$0xff]
    %v43 = vld [vmem:[%s1 + $0x10] sm:$0xff]
    %v44 = vld [vmem:[%s1 + $0x18] sm:$0xff]
    %v45 = vld [vmem:[%s1 + $0x20] sm:$0xff]
    %v46 = vld [vmem:[%s1 + $0x28] sm:$0xff]
    %vm47 = vcmask 392192
    %v49 = vsel %vm47, %v33, 0
    %v52 = vsel %vm47, %v34, 0
    %v55 = vsel %vm47, %v35, 0
    %v58 = vsel %vm47, %v36, 0
    %v61 = vsel %vm47, %v37, 0
    %v64 = vsel %vm47, %v38, 0
    %v67 = vsel %vm47, %v39, 0
    %v70 = vsel %vm47, %v40, 0
    %72 = vmatprep.subr.mxu0 0.0
    %v73 = vand.u32 %v41, 4294901760
    %74 = vmatpush1.msra.mxu0 %v73
    %75 = vmatprep.subr.mxu0 0.0
    %v76 = vand.u32 %v42, 4294901760
    %77 = vmatpush1.msra.mxu0 %v76
    %78 = vmatprep.subr.mxu0 0.0
    %v79 = vand.u32 %v43, 4294901760
    %80 = vmatpush1.msra.mxu0 %v79
    %81 = vmatprep.subr.mxu0 0.0
    %v82 = vand.u32 %v44, 4294901760
    %83 = vmatpush1.msra.mxu0 %v82
    %84 = vmatprep.subr.mxu0 0.0
    %v85 = vand.u32 %v45, 4294901760
    %86 = vmatpush1.msra.mxu0 %v85
    %87 = vmatprep.subr.mxu0 0.0
    %v88 = vand.u32 %v46, 4294901760
    %89 = vmatpush1.msra.mxu0 %v88
    %90 = vmatprep.subr.mxu0 0.0
    %91 = vmatpush1.msra.mxu0 0.0
    %92 = vmatprep.subr.mxu0 0.0
    %93 = vmatpush1.msra.mxu0 0.0
    %94 = vmatprep.subr.mxu0 0.0
    %95 = vmatpush1.msra.mxu0 0.0
    %96 = vmatprep.subr.mxu0 0.0
    %97 = vmatpush1.msra.mxu0 0.0
    %98 = vmatprep.subr.mxu0 0.0
    %99 = vmatpush1.msra.mxu0 0.0
    %100 = vmatprep.subr.mxu0 0.0
    %101 = vmatpush1.msra.mxu0 0.0
    %102 = vmatprep.subr.mxu0 0.0
    %103 = vmatpush1.msra.mxu0 0.0
    %104 = vmatprep.subr.mxu0 0.0
    %105 = vmatpush1.msra.mxu0 0.0
    %106 = vmatprep.subr.mxu0 0.0
    %107 = vmatpush1.msra.mxu0 0.0
    %108 = vmatprep.subr.mxu0 0.0
    %109 = vmatpush1.msra.mxu0 0.0
    %110 = vmatprep.subr.mxu0 0.0
    %111 = vmatpush1.msra.mxu0 0.0
    %112 = vmatprep.subr.mxu0 0.0
    %113 = vmatpush1.msra.mxu0 0.0
    %114 = vmatprep.subr.mxu0 0.0
    %115 = vmatpush1.msra.mxu0 0.0
    %116 = vmatprep.subr.mxu0 0.0
    %117 = vmatpush1.msra.mxu0 0.0
    %118 = vmatprep.subr.mxu0 0.0
    %119 = vmatpush1.msra.mxu0 0.0
    %120 = vmatprep.subr.mxu0 0.0
    %121 = vmatpush1.msra.mxu0 0.0
    %122 = vmatprep.subr.mxu0 0.0
    %123 = vmatpush1.msra.mxu0 0.0
    %124 = vmatprep.subr.mxu0 0.0
    %125 = vmatpush1.msra.mxu0 0.0
    %126 = vmatprep.subr.mxu0 0.0
    %127 = vmatpush1.msra.mxu0 0.0
    %128 = vmatprep.subr.mxu0 0.0
    %129 = vmatpush1.msra.mxu0 0.0
    %130 = vmatprep.subr.mxu0 0.0
    %131 = vmatpush1.msra.mxu0 0.0
    %132 = vmatprep.subr.mxu0 0.0
    %133 = vmatpush1.msra.mxu0 0.0
    %134 = vmatprep.subr.mxu0 0.0
    %135 = vmatpush1.msra.mxu0 0.0
    %136 = vmatprep.subr.mxu0 0.0
    %137 = vmatpush1.msra.mxu0 0.0
    %138 = vmatprep.subr.mxu0 0.0
    %139 = vmatpush1.msra.mxu0 0.0
    %140 = vmatprep.subr.mxu0 0.0
    %141 = vmatpush1.msra.mxu0 0.0
    %142 = vmatprep.mubr.f32.mxu0 0.0
    %v143 = vand.u32 %v49, 4294901760
    %v144 = vsub.f32 %v49, %v143
    %v145 = vand.u32 %v144, 4294901760
    %v146 = vsub.f32 %v144, %v145
    %v147 = vand.u32 %v146, 4294901760
    %148 = vmatmul.mubr.f32.gmra.mrb[0].mxu0 %v147
    %v149 = vpop.f32.mrb[0].mxu0
    %v150 = vadd.f32 0.0, %v149
    %v151 = vpop.f32.mrb[0].mxu0
    %152 = vmatprep.mubr.f32.mxu0 0.0
    %v153 = vand.u32 %v52, 4294901760
    %v154 = vsub.f32 %v52, %v153
    %v155 = vand.u32 %v154, 4294901760
    %v156 = vsub.f32 %v154, %v155
    %v157 = vand.u32 %v156, 4294901760
    %158 = vmatmul.mubr.f32.gmra.mrb[0].mxu0 %v157
    %v159 = vpop.f32.mrb[0].mxu0
    %v160 = vadd.f32 0.0, %v159
    %v161 = vpop.f32.mrb[0].mxu0
    %162 = vmatprep.mubr.f32.mxu0 0.0
    %v163 = vand.u32 %v55, 4294901760
    %v164 = vsub.f32 %v55, %v163
    %v165 = vand.u32 %v164, 4294901760
    %v166 = vsub.f32 %v164, %v165
    %v167 = vand.u32 %v166, 4294901760
    %168 = vmatmul.mubr.f32.gmra.mrb[0].mxu0 %v167
    %v169 = vpop.f32.mrb[0].mxu0
    %v170 = vadd.f32 0.0, %v169
    %v171 = vpop.f32.mrb[0].mxu0
    %172 = vmatprep.mubr.f32.mxu0 0.0
    %v173 = vand.u32 %v58, 4294901760
    %v174 = vsub.f32 %v58, %v173
    %v175 = vand.u32 %v174, 4294901760
    %v176 = vsub.f32 %v174, %v175
    %v177 = vand.u32 %v176, 4294901760
    %178 = vmatmul.mubr.f32.gmra.mrb[0].mxu0 %v177
    %v179 = vpop.f32.mrb[0].mxu0
    %v180 = vadd.f32 0.0, %v179
    %v181 = vpop.f32.mrb[0].mxu0
    %182 = vmatprep.mubr.f32.mxu0 0.0
    %v183 = vand.u32 %v61, 4294901760
    %v184 = vsub.f32 %v61, %v183
    %v185 = vand.u32 %v184, 4294901760
    %v186 = vsub.f32 %v184, %v185
    %v187 = vand.u32 %v186, 4294901760
    %188 = vmatmul.mubr.f32.gmra.mrb[0].mxu0 %v187
    %v189 = vpop.f32.mrb[0].mxu0
    %v190 = vadd.f32 0.0, %v189
    %v191 = vpop.f32.mrb[0].mxu0
    %192 = vmatprep.mubr.f32.mxu0 0.0
    %v193 = vand.u32 %v64, 4294901760
    %v194 = vsub.f32 %v64, %v193
    %v195 = vand.u32 %v194, 4294901760
    %v196 = vsub.f32 %v194, %v195
    %v197 = vand.u32 %v196, 4294901760
    %198 = vmatmul.mubr.f32.gmra.mrb[0].mxu0 %v197
    %v199 = vpop.f32.mrb[0].mxu0
    %v200 = vadd.f32 0.0, %v199
    %v201 = vpop.f32.mrb[0].mxu0
    %202 = vmatprep.mubr.f32.mxu0 0.0
    %v203 = vand.u32 %v67, 4294901760
    %v204 = vsub.f32 %v67, %v203
    %v205 = vand.u32 %v204, 4294901760
    %v206 = vsub.f32 %v204, %v205
    %v207 = vand.u32 %v206, 4294901760
    %208 = vmatmul.mubr.f32.gmra.mrb[0].mxu0 %v207
    %v209 = vpop.f32.mrb[0].mxu0
    %v210 = vadd.f32 0.0, %v209
    %v211 = vpop.f32.mrb[0].mxu0
    %212 = vmatprep.mubr.f32.mxu0 0.0
    %v213 = vand.u32 %v70, 4294901760
    %v214 = vsub.f32 %v70, %v213
    %v215 = vand.u32 %v214, 4294901760
    %v216 = vsub.f32 %v214, %v215
    %v217 = vand.u32 %v216, 4294901760
    %218 = vmatmul.mubr.f32.gmra.mrb[0].mxu0 %v217
    %v219 = vpop.f32.mrb[0].mxu0
    %v220 = vadd.f32 0.0, %v219
    %v221 = vpop.f32.mrb[0].mxu0
    %222 = vdwg.mxu0
    %223 = vmatprep.subr.mxu0 0.0
    %v224 = vand.u32 %v41, 4294901760
    %v225 = vsub.f32 %v41, %v224
    %v226 = vand.u32 %v225, 4294901760
    %v227 = vsub.f32 %v225, %v226
    %v228 = vand.u32 %v227, 4294901760
    %229 = vmatpush1.msra.mxu0 %v228
    %230 = vmatprep.subr.mxu0 0.0
    %v231 = vand.u32 %v42, 4294901760
    %v232 = vsub.f32 %v42, %v231
    %v233 = vand.u32 %v232, 4294901760
    %v234 = vsub.f32 %v232, %v233
    %v235 = vand.u32 %v234, 4294901760
    %236 = vmatpush1.msra.mxu0 %v235
    %237 = vmatprep.subr.mxu0 0.0
    %v238 = vand.u32 %v43, 4294901760
    %v239 = vsub.f32 %v43, %v238
    %v240 = vand.u32 %v239, 4294901760
    %v241 = vsub.f32 %v239, %v240
    %v242 = vand.u32 %v241, 4294901760
    %243 = vmatpush1.msra.mxu0 %v242
    %244 = vmatprep.subr.mxu0 0.0
    %v245 = vand.u32 %v44, 4294901760
    %v246 = vsub.f32 %v44, %v245
    %v247 = vand.u32 %v246, 4294901760
    %v248 = vsub.f32 %v246, %v247
    %v249 = vand.u32 %v248, 4294901760
    %250 = vmatpush1.msra.mxu0 %v249
    %251 = vmatprep.subr.mxu0 0.0
    %v252 = vand.u32 %v45, 4294901760
    %v253 = vsub.f32 %v45, %v252
    %v254 = vand.u32 %v253, 4294901760
    %v255 = vsub.f32 %v253, %v254
    %v256 = vand.u32 %v255, 4294901760
    %257 = vmatpush1.msra.mxu0 %v256
    %258 = vmatprep.subr.mxu0 0.0
    %v259 = vand.u32 %v46, 4294901760
    %v260 = vsub.f32 %v46, %v259
    %v261 = vand.u32 %v260, 4294901760
    %v262 = vsub.f32 %v260, %v261
    %v263 = vand.u32 %v262, 4294901760
    %264 = vmatpush1.msra.mxu0 %v263
    %265 = vmatprep.subr.mxu0 0.0
    %266 = vmatpush1.msra.mxu0 0.0
    %267 = vmatprep.subr.mxu0 0.0
    %268 = vmatpush1.msra.mxu0 0.0
    %269 = vmatprep.subr.mxu0 0.0
    %270 = vmatpush1.msra.mxu0 0.0
    %271 = vmatprep.subr.mxu0 0.0
    %272 = vmatpush1.msra.mxu0 0.0
    %273 = vmatprep.subr.mxu0 0.0
    %274 = vmatpush1.msra.mxu0 0.0
    %275 = vmatprep.subr.mxu0 0.0
    %276 = vmatpush1.msra.mxu0 0.0
    %277 = vmatprep.subr.mxu0 0.0
    %278 = vmatpush1.msra.mxu0 0.0
    %279 = vmatprep.subr.mxu0 0.0
    %280 = vmatpush1.msra.mxu0 0.0
    %281 = vmatprep.subr.mxu0 0.0
    %282 = vmatpush1.msra.mxu0 0.0
    %283 = vmatprep.subr.mxu0 0.0
    %284 = vmatpush1.msra.mxu0 0.0
    %285 = vmatprep.subr.mxu0 0.0
    %286 = vmatpush1.msra.mxu0 0.0
    %287 = vmatprep.subr.mxu0 0.0
    %288 = vmatpush1.msra.mxu0 0.0
    %289 = vmatprep.subr.mxu0 0.0
    %290 = vmatpush1.msra.mxu0 0.0
    %291 = vmatprep.subr.mxu0 0.0
    %292 = vmatpush1.msra.mxu0 0.0
    %293 = vmatprep.subr.mxu0 0.0
    %294 = vmatpush1.msra.mxu0 0.0
    %295 = vmatprep.subr.mxu0 0.0
    %296 = vmatpush1.msra.mxu0 0.0
    %297 = vmatprep.subr.mxu0 0.0
    %298 = vmatpush1.msra.mxu0 0.0
    %299 = vmatprep.subr.mxu0 0.0
    %300 = vmatpush1.msra.mxu0 0.0
    %301 = vmatprep.subr.mxu0 0.0
    %302 = vmatpush1.msra.mxu0 0.0
    %303 = vmatprep.subr.mxu0 0.0
    %304 = vmatpush1.msra.mxu0 0.0
    %305 = vmatprep.subr.mxu0 0.0
    %306 = vmatpush1.msra.mxu0 0.0
    %307 = vmatprep.subr.mxu0 0.0
    %308 = vmatpush1.msra.mxu0 0.0
    %309 = vmatprep.subr.mxu0 0.0
    %310 = vmatpush1.msra.mxu0 0.0
    %311 = vmatprep.subr.mxu0 0.0
    %312 = vmatpush1.msra.mxu0 0.0
    %313 = vmatprep.subr.mxu0 0.0
    %314 = vmatpush1.msra.mxu0 0.0
    %315 = vmatprep.subr.mxu0 0.0
    %316 = vmatpush1.msra.mxu0 0.0
    %317 = vmatprep.mubr.f32.mxu0 0.0
    %v318 = vand.u32 %v49, 4294901760
    %319 = vmatmul.mubr.f32.gmra.mrb[0].mxu0 %v318
    %v320 = vpop.f32.mrb[0].mxu0
    %v321 = vadd.f32 %v150, %v320
    %v322 = vpop.f32.mrb[0].mxu0
    %323 = vmatprep.mubr.f32.mxu0 0.0
    %v324 = vand.u32 %v52, 4294901760
    %325 = vmatmul.mubr.f32.gmra.mrb[0].mxu0 %v324
    %v326 = vpop.f32.mrb[0].mxu0
    %v327 = vadd.f32 %v160, %v326
    %v328 = vpop.f32.mrb[0].mxu0
    %329 = vmatprep.mubr.f32.mxu0 0.0
    %v330 = vand.u32 %v55, 4294901760
    %331 = vmatmul.mubr.f32.gmra.mrb[0].mxu0 %v330
    %v332 = vpop.f32.mrb[0].mxu0
    %v333 = vadd.f32 %v170, %v332
    %v334 = vpop.f32.mrb[0].mxu0
    %335 = vmatprep.mubr.f32.mxu0 0.0
    %v336 = vand.u32 %v58, 4294901760
    %337 = vmatmul.mubr.f32.gmra.mrb[0].mxu0 %v336
    %v338 = vpop.f32.mrb[0].mxu0
    %v339 = vadd.f32 %v180, %v338
    %v340 = vpop.f32.mrb[0].mxu0
    %341 = vmatprep.mubr.f32.mxu0 0.0
    %v342 = vand.u32 %v61, 4294901760
    %343 = vmatmul.mubr.f32.gmra.mrb[0].mxu0 %v342
    %v344 = vpop.f32.mrb[0].mxu0
    %v345 = vadd.f32 %v190, %v344
    %v346 = vpop.f32.mrb[0].mxu0
    %347 = vmatprep.mubr.f32.mxu0 0.0
    %v348 = vand.u32 %v64, 4294901760
    %349 = vmatmul.mubr.f32.gmra.mrb[0].mxu0 %v348
    %v350 = vpop.f32.mrb[0].mxu0
    %v351 = vadd.f32 %v200, %v350
    %v352 = vpop.f32.mrb[0].mxu0
    %353 = vmatprep.mubr.f32.mxu0 0.0
    %v354 = vand.u32 %v67, 4294901760
    %355 = vmatmul.mubr.f32.gmra.mrb[0].mxu0 %v354
    %v356 = vpop.f32.mrb[0].mxu0
    %v357 = vadd.f32 %v210, %v356
    %v358 = vpop.f32.mrb[0].mxu0
    %359 = vmatprep.mubr.f32.mxu0 0.0
    %v360 = vand.u32 %v70, 4294901760
    %361 = vmatmul.mubr.f32.gmra.mrb[0].mxu0 %v360
    %v362 = vpop.f32.mrb[0].mxu0
    %v363 = vadd.f32 %v220, %v362
    %v364 = vpop.f32.mrb[0].mxu0
    %365 = vdwg.mxu0
    %366 = vmatprep.subr.mxu0 0.0
    %v367 = vand.u32 %v41, 4294901760
    %v368 = vsub.f32 %v41, %v367
    %369 = vmatpush1.msra.mxu0 %v368
    %370 = vmatprep.subr.mxu0 0.0
    %v371 = vand.u32 %v42, 4294901760
    %v372 = vsub.f32 %v42, %v371
    %373 = vmatpush1.msra.mxu0 %v372
    %374 = vmatprep.subr.mxu0 0.0
    %v375 = vand.u32 %v43, 4294901760
    %v376 = vsub.f32 %v43, %v375
    %377 = vmatpush1.msra.mxu0 %v376
    %378 = vmatprep.subr.mxu0 0.0
    %v379 = vand.u32 %v44, 4294901760
    %v380 = vsub.f32 %v44, %v379
    %381 = vmatpush1.msra.mxu0 %v380
    %382 = vmatprep.subr.mxu0 0.0
    %v383 = vand.u32 %v45, 4294901760
    %v384 = vsub.f32 %v45, %v383
    %385 = vmatpush1.msra.mxu0 %v384
    %386 = vmatprep.subr.mxu0 0.0
    %v387 = vand.u32 %v46, 4294901760
    %v388 = vsub.f32 %v46, %v387
    %389 = vmatpush1.msra.mxu0 %v388
    %390 = vmatprep.subr.mxu0 0.0
    %391 = vmatpush1.msra.mxu0 0.0
    %392 = vmatprep.subr.mxu0 0.0
    %393 = vmatpush1.msra.mxu0 0.0
    %394 = vmatprep.subr.mxu0 0.0
    %395 = vmatpush1.msra.mxu0 0.0
    %396 = vmatprep.subr.mxu0 0.0
    %397 = vmatpush1.msra.mxu0 0.0
    %398 = vmatprep.subr.mxu0 0.0
    %399 = vmatpush1.msra.mxu0 0.0
    %400 = vmatprep.subr.mxu0 0.0
    %401 = vmatpush1.msra.mxu0 0.0
    %402 = vmatprep.subr.mxu0 0.0
    %403 = vmatpush1.msra.mxu0 0.0
    %404 = vmatprep.subr.mxu0 0.0
    %405 = vmatpush1.msra.mxu0 0.0
    %406 = vmatprep.subr.mxu0 0.0
    %407 = vmatpush1.msra.mxu0 0.0
    %408 = vmatprep.subr.mxu0 0.0
    %409 = vmatpush1.msra.mxu0 0.0
    %410 = vmatprep.subr.mxu0 0.0
    %411 = vmatpush1.msra.mxu0 0.0
    %412 = vmatprep.subr.mxu0 0.0
    %413 = vmatpush1.msra.mxu0 0.0
    %414 = vmatprep.subr.mxu0 0.0
    %415 = vmatpush1.msra.mxu0 0.0
    %416 = vmatprep.subr.mxu0 0.0
    %417 = vmatpush1.msra.mxu0 0.0
    %418 = vmatprep.subr.mxu0 0.0
    %419 = vmatpush1.msra.mxu0 0.0
    %420 = vmatprep.subr.mxu0 0.0
    %421 = vmatpush1.msra.mxu0 0.0
    %422 = vmatprep.subr.mxu0 0.0
    %423 = vmatpush1.msra.mxu0 0.0
    %424 = vmatprep.subr.mxu0 0.0
    %425 = vmatpush1.msra.mxu0 0.0
    %426 = vmatprep.subr.mxu0 0.0
    %427 = vmatpush1.msra.mxu0 0.0
    %428 = vmatprep.subr.mxu0 0.0
    %429 = vmatpush1.msra.mxu0 0.0
    %430 = vmatprep.subr.mxu0 0.0
    %431 = vmatpush1.msra.mxu0 0.0
    %432 = vmatprep.subr.mxu0 0.0
    %433 = vmatpush1.msra.mxu0 0.0
    %434 = vmatprep.subr.mxu0 0.0
    %435 = vmatpush1.msra.mxu0 0.0
    %436 = vmatprep.subr.mxu0 0.0
    %437 = vmatpush1.msra.mxu0 0.0
    %438 = vmatprep.subr.mxu0 0.0
    %439 = vmatpush1.msra.mxu0 0.0
    %440 = vmatprep.subr.mxu0 0.0
    %441 = vmatpush1.msra.mxu0 0.0
    %442 = vmatprep.mubr.f32.mxu0 0.0
    %v443 = vand.u32 %v49, 4294901760
    %v444 = vsub.f32 %v49, %v443
    %445 = vmatmul.mubr.f32.gmra.mrb[0].mxu0 %v444
    %v446 = vpop.f32.mrb[0].mxu0
    %v447 = vadd.f32 %v321, %v446
    %v448 = vpop.f32.mrb[0].mxu0
    %449 = vmatprep.mubr.f32.mxu0 0.0
    %v450 = vand.u32 %v52, 4294901760
    %v451 = vsub.f32 %v52, %v450
    %452 = vmatmul.mubr.f32.gmra.mrb[0].mxu0 %v451
    %v453 = vpop.f32.mrb[0].mxu0
    %v454 = vadd.f32 %v327, %v453
    %v455 = vpop.f32.mrb[0].mxu0
    %456 = vmatprep.mubr.f32.mxu0 0.0
    %v457 = vand.u32 %v55, 4294901760
    %v458 = vsub.f32 %v55, %v457
    %459 = vmatmul.mubr.f32.gmra.mrb[0].mxu0 %v458
    %v460 = vpop.f32.mrb[0].mxu0
    %v461 = vadd.f32 %v333, %v460
    %v462 = vpop.f32.mrb[0].mxu0
    %463 = vmatprep.mubr.f32.mxu0 0.0
    %v464 = vand.u32 %v58, 4294901760
    %v465 = vsub.f32 %v58, %v464
    %466 = vmatmul.mubr.f32.gmra.mrb[0].mxu0 %v465
    %v467 = vpop.f32.mrb[0].mxu0
    %v468 = vadd.f32 %v339, %v467
    %v469 = vpop.f32.mrb[0].mxu0
    %470 = vmatprep.mubr.f32.mxu0 0.0
    %v471 = vand.u32 %v61, 4294901760
    %v472 = vsub.f32 %v61, %v471
    %473 = vmatmul.mubr.f32.gmra.mrb[0].mxu0 %v472
    %v474 = vpop.f32.mrb[0].mxu0
    %v475 = vadd.f32 %v345, %v474
    %v476 = vpop.f32.mrb[0].mxu0
    %477 = vmatprep.mubr.f32.mxu0 0.0
    %v478 = vand.u32 %v64, 4294901760
    %v479 = vsub.f32 %v64, %v478
    %480 = vmatmul.mubr.f32.gmra.mrb[0].mxu0 %v479
    %v481 = vpop.f32.mrb[0].mxu0
    %v482 = vadd.f32 %v351, %v481
    %v483 = vpop.f32.mrb[0].mxu0
    %484 = vmatprep.mubr.f32.mxu0 0.0
    %v485 = vand.u32 %v67, 4294901760
    %v486 = vsub.f32 %v67, %v485
    %487 = vmatmul.mubr.f32.gmra.mrb[0].mxu0 %v486
    %v488 = vpop.f32.mrb[0].mxu0
    %v489 = vadd.f32 %v357, %v488
    %v490 = vpop.f32.mrb[0].mxu0
    %491 = vmatprep.mubr.f32.mxu0 0.0
    %v492 = vand.u32 %v70, 4294901760
    %v493 = vsub.f32 %v70, %v492
    %494 = vmatmul.mubr.f32.gmra.mrb[0].mxu0 %v493
    %v495 = vpop.f32.mrb[0].mxu0
    %v496 = vadd.f32 %v363, %v495
    %v497 = vpop.f32.mrb[0].mxu0
    %498 = vdwg.mxu0
    %499 = vmatprep.subr.mxu0 0.0
    %v500 = vand.u32 %v41, 4294901760
    %501 = vmatpush1.msra.mxu0 %v500
    %502 = vmatprep.subr.mxu0 0.0
    %v503 = vand.u32 %v42, 4294901760
    %504 = vmatpush1.msra.mxu0 %v503
    %505 = vmatprep.subr.mxu0 0.0
    %v506 = vand.u32 %v43, 4294901760
    %507 = vmatpush1.msra.mxu0 %v506
    %508 = vmatprep.subr.mxu0 0.0
    %v509 = vand.u32 %v44, 4294901760
    %510 = vmatpush1.msra.mxu0 %v509
    %511 = vmatprep.subr.mxu0 0.0
    %v512 = vand.u32 %v45, 4294901760
    %513 = vmatpush1.msra.mxu0 %v512
    %514 = vmatprep.subr.mxu0 0.0
    %v515 = vand.u32 %v46, 4294901760
    %516 = vmatpush1.msra.mxu0 %v515
    %517 = vmatprep.subr.mxu0 0.0
    %518 = vmatpush1.msra.mxu0 0.0
    %519 = vmatprep.subr.mxu0 0.0
    %520 = vmatpush1.msra.mxu0 0.0
    %521 = vmatprep.subr.mxu0 0.0
    %522 = vmatpush1.msra.mxu0 0.0
    %523 = vmatprep.subr.mxu0 0.0
    %524 = vmatpush1.msra.mxu0 0.0
    %525 = vmatprep.subr.mxu0 0.0
    %526 = vmatpush1.msra.mxu0 0.0
    %527 = vmatprep.subr.mxu0 0.0
    %528 = vmatpush1.msra.mxu0 0.0
    %529 = vmatprep.subr.mxu0 0.0
    %530 = vmatpush1.msra.mxu0 0.0
    %531 = vmatprep.subr.mxu0 0.0
    %532 = vmatpush1.msra.mxu0 0.0
    %533 = vmatprep.subr.mxu0 0.0
    %534 = vmatpush1.msra.mxu0 0.0
    %535 = vmatprep.subr.mxu0 0.0
    %536 = vmatpush1.msra.mxu0 0.0
    %537 = vmatprep.subr.mxu0 0.0
    %538 = vmatpush1.msra.mxu0 0.0
    %539 = vmatprep.subr.mxu0 0.0
    %540 = vmatpush1.msra.mxu0 0.0
    %541 = vmatprep.subr.mxu0 0.0
    %542 = vmatpush1.msra.mxu0 0.0
    %543 = vmatprep.subr.mxu0 0.0
    %544 = vmatpush1.msra.mxu0 0.0
    %545 = vmatprep.subr.mxu0 0.0
    %546 = vmatpush1.msra.mxu0 0.0
    %547 = vmatprep.subr.mxu0 0.0
    %548 = vmatpush1.msra.mxu0 0.0
    %549 = vmatprep.subr.mxu0 0.0
    %550 = vmatpush1.msra.mxu0 0.0
    %551 = vmatprep.subr.mxu0 0.0
    %552 = vmatpush1.msra.mxu0 0.0
    %553 = vmatprep.subr.mxu0 0.0
    %554 = vmatpush1.msra.mxu0 0.0
    %555 = vmatprep.subr.mxu0 0.0
    %556 = vmatpush1.msra.mxu0 0.0
    %557 = vmatprep.subr.mxu0 0.0
    %558 = vmatpush1.msra.mxu0 0.0
    %559 = vmatprep.subr.mxu0 0.0
    %560 = vmatpush1.msra.mxu0 0.0
    %561 = vmatprep.subr.mxu0 0.0
    %562 = vmatpush1.msra.mxu0 0.0
    %563 = vmatprep.subr.mxu0 0.0
    %564 = vmatpush1.msra.mxu0 0.0
    %565 = vmatprep.subr.mxu0 0.0
    %566 = vmatpush1.msra.mxu0 0.0
    %567 = vmatprep.subr.mxu0 0.0
    %568 = vmatpush1.msra.mxu0 0.0
    %569 = vmatprep.mubr.f32.mxu0 0.0
    %v570 = vand.u32 %v49, 4294901760
    %v571 = vsub.f32 %v49, %v570
    %v572 = vand.u32 %v571, 4294901760
    %573 = vmatmul.mubr.f32.gmra.mrb[0].mxu0 %v572
    %v574 = vpop.f32.mrb[0].mxu0
    %v575 = vadd.f32 %v447, %v574
    %v576 = vpop.f32.mrb[0].mxu0
    %577 = vmatprep.mubr.f32.mxu0 0.0
    %v578 = vand.u32 %v52, 4294901760
    %v579 = vsub.f32 %v52, %v578
    %v580 = vand.u32 %v579, 4294901760
    %581 = vmatmul.mubr.f32.gmra.mrb[0].mxu0 %v580
    %v582 = vpop.f32.mrb[0].mxu0
    %v583 = vadd.f32 %v454, %v582
    %v584 = vpop.f32.mrb[0].mxu0
    %585 = vmatprep.mubr.f32.mxu0 0.0
    %v586 = vand.u32 %v55, 4294901760
    %v587 = vsub.f32 %v55, %v586
    %v588 = vand.u32 %v587, 4294901760
    %589 = vmatmul.mubr.f32.gmra.mrb[0].mxu0 %v588
    %v590 = vpop.f32.mrb[0].mxu0
    %v591 = vadd.f32 %v461, %v590
    %v592 = vpop.f32.mrb[0].mxu0
    %593 = vmatprep.mubr.f32.mxu0 0.0
    %v594 = vand.u32 %v58, 4294901760
    %v595 = vsub.f32 %v58, %v594
    %v596 = vand.u32 %v595, 4294901760
    %597 = vmatmul.mubr.f32.gmra.mrb[0].mxu0 %v596
    %v598 = vpop.f32.mrb[0].mxu0
    %v599 = vadd.f32 %v468, %v598
    %v600 = vpop.f32.mrb[0].mxu0
    %601 = vmatprep.mubr.f32.mxu0 0.0
    %v602 = vand.u32 %v61, 4294901760
    %v603 = vsub.f32 %v61, %v602
    %v604 = vand.u32 %v603, 4294901760
    %605 = vmatmul.mubr.f32.gmra.mrb[0].mxu0 %v604
    %v606 = vpop.f32.mrb[0].mxu0
    %v607 = vadd.f32 %v475, %v606
    %v608 = vpop.f32.mrb[0].mxu0
    %609 = vmatprep.mubr.f32.mxu0 0.0
    %v610 = vand.u32 %v64, 4294901760
    %v611 = vsub.f32 %v64, %v610
    %v612 = vand.u32 %v611, 4294901760
    %613 = vmatmul.mubr.f32.gmra.mrb[0].mxu0 %v612
    %v614 = vpop.f32.mrb[0].mxu0
    %v615 = vadd.f32 %v482, %v614
    %v616 = vpop.f32.mrb[0].mxu0
    %617 = vmatprep.mubr.f32.mxu0 0.0
    %v618 = vand.u32 %v67, 4294901760
    %v619 = vsub.f32 %v67, %v618
    %v620 = vand.u32 %v619, 4294901760
    %621 = vmatmul.mubr.f32.gmra.mrb[0].mxu0 %v620
    %v622 = vpop.f32.mrb[0].mxu0
    %v623 = vadd.f32 %v489, %v622
    %v624 = vpop.f32.mrb[0].mxu0
    %625 = vmatprep.mubr.f32.mxu0 0.0
    %v626 = vand.u32 %v70, 4294901760
    %v627 = vsub.f32 %v70, %v626
    %v628 = vand.u32 %v627, 4294901760
    %629 = vmatmul.mubr.f32.gmra.mrb[0].mxu0 %v628
    %v630 = vpop.f32.mrb[0].mxu0
    %v631 = vadd.f32 %v496, %v630
    %v632 = vpop.f32.mrb[0].mxu0
    %633 = vdwg.mxu0
    %634 = vmatprep.subr.mxu0 0.0
    %v635 = vand.u32 %v41, 4294901760
    %v636 = vsub.f32 %v41, %v635
    %v637 = vand.u32 %v636, 4294901760
    %638 = vmatpush1.msra.mxu0 %v637
    %639 = vmatprep.subr.mxu0 0.0
    %v640 = vand.u32 %v42, 4294901760
    %v641 = vsub.f32 %v42, %v640
    %v642 = vand.u32 %v641, 4294901760
    %643 = vmatpush1.msra.mxu0 %v642
    %644 = vmatprep.subr.mxu0 0.0
    %v645 = vand.u32 %v43, 4294901760
    %v646 = vsub.f32 %v43, %v645
    %v647 = vand.u32 %v646, 4294901760
    %648 = vmatpush1.msra.mxu0 %v647
    %649 = vmatprep.subr.mxu0 0.0
    %v650 = vand.u32 %v44, 4294901760
    %v651 = vsub.f32 %v44, %v650
    %v652 = vand.u32 %v651, 4294901760
    %653 = vmatpush1.msra.mxu0 %v652
    %654 = vmatprep.subr.mxu0 0.0
    %v655 = vand.u32 %v45, 4294901760
    %v656 = vsub.f32 %v45, %v655
    %v657 = vand.u32 %v656, 4294901760
    %658 = vmatpush1.msra.mxu0 %v657
    %659 = vmatprep.subr.mxu0 0.0
    %v660 = vand.u32 %v46, 4294901760
    %v661 = vsub.f32 %v46, %v660
    %v662 = vand.u32 %v661, 4294901760
    %663 = vmatpush1.msra.mxu0 %v662
    %664 = vmatprep.subr.mxu0 0.0
    %665 = vmatpush1.msra.mxu0 0.0
    %666 = vmatprep.subr.mxu0 0.0
    %667 = vmatpush1.msra.mxu0 0.0
    %668 = vmatprep.subr.mxu0 0.0
    %669 = vmatpush1.msra.mxu0 0.0
    %670 = vmatprep.subr.mxu0 0.0
    %671 = vmatpush1.msra.mxu0 0.0
    %672 = vmatprep.subr.mxu0 0.0
    %673 = vmatpush1.msra.mxu0 0.0
    %674 = vmatprep.subr.mxu0 0.0
    %675 = vmatpush1.msra.mxu0 0.0
    %676 = vmatprep.subr.mxu0 0.0
    %677 = vmatpush1.msra.mxu0 0.0
    %678 = vmatprep.subr.mxu0 0.0
    %679 = vmatpush1.msra.mxu0 0.0
    %680 = vmatprep.subr.mxu0 0.0
    %681 = vmatpush1.msra.mxu0 0.0
    %682 = vmatprep.subr.mxu0 0.0
    %683 = vmatpush1.msra.mxu0 0.0
    %684 = vmatprep.subr.mxu0 0.0
    %685 = vmatpush1.msra.mxu0 0.0
    %686 = vmatprep.subr.mxu0 0.0
    %687 = vmatpush1.msra.mxu0 0.0
    %688 = vmatprep.subr.mxu0 0.0
    %689 = vmatpush1.msra.mxu0 0.0
    %690 = vmatprep.subr.mxu0 0.0
    %691 = vmatpush1.msra.mxu0 0.0
    %692 = vmatprep.subr.mxu0 0.0
    %693 = vmatpush1.msra.mxu0 0.0
    %694 = vmatprep.subr.mxu0 0.0
    %695 = vmatpush1.msra.mxu0 0.0
    %696 = vmatprep.subr.mxu0 0.0
    %697 = vmatpush1.msra.mxu0 0.0
    %698 = vmatprep.subr.mxu0 0.0
    %699 = vmatpush1.msra.mxu0 0.0
    %700 = vmatprep.subr.mxu0 0.0
    %701 = vmatpush1.msra.mxu0 0.0
    %702 = vmatprep.subr.mxu0 0.0
    %703 = vmatpush1.msra.mxu0 0.0
    %704 = vmatprep.subr.mxu0 0.0
    %705 = vmatpush1.msra.mxu0 0.0
    %706 = vmatprep.subr.mxu0 0.0
    %707 = vmatpush1.msra.mxu0 0.0
    %708 = vmatprep.subr.mxu0 0.0
    %709 = vmatpush1.msra.mxu0 0.0
    %710 = vmatprep.subr.mxu0 0.0
    %711 = vmatpush1.msra.mxu0 0.0
    %712 = vmatprep.subr.mxu0 0.0
    %713 = vmatpush1.msra.mxu0 0.0
    %714 = vmatprep.subr.mxu0 0.0
    %715 = vmatpush1.msra.mxu0 0.0
    %716 = vmatprep.mubr.f32.mxu0 0.0
    %v717 = vand.u32 %v49, 4294901760
    %718 = vmatmul.mubr.f32.gmra.mrb[0].mxu0 %v717
    %v719 = vpop.f32.mrb[0].mxu0
    %v720 = vadd.f32 %v575, %v719
    %v721 = vpop.f32.mrb[0].mxu0
    %722 = vmatprep.mubr.f32.mxu0 0.0
    %v723 = vand.u32 %v52, 4294901760
    %724 = vmatmul.mubr.f32.gmra.mrb[0].mxu0 %v723
    %v725 = vpop.f32.mrb[0].mxu0
    %v726 = vadd.f32 %v583, %v725
    %v727 = vpop.f32.mrb[0].mxu0
    %728 = vmatprep.mubr.f32.mxu0 0.0
    %v729 = vand.u32 %v55, 4294901760
    %730 = vmatmul.mubr.f32.gmra.mrb[0].mxu0 %v729
    %v731 = vpop.f32.mrb[0].mxu0
    %v732 = vadd.f32 %v591, %v731
    %v733 = vpop.f32.mrb[0].mxu0
    %734 = vmatprep.mubr.f32.mxu0 0.0
    %v735 = vand.u32 %v58, 4294901760
    %736 = vmatmul.mubr.f32.gmra.mrb[0].mxu0 %v735
    %v737 = vpop.f32.mrb[0].mxu0
    %v738 = vadd.f32 %v599, %v737
    %v739 = vpop.f32.mrb[0].mxu0
    %740 = vmatprep.mubr.f32.mxu0 0.0
    %v741 = vand.u32 %v61, 4294901760
    %742 = vmatmul.mubr.f32.gmra.mrb[0].mxu0 %v741
    %v743 = vpop.f32.mrb[0].mxu0
    %v744 = vadd.f32 %v607, %v743
    %v745 = vpop.f32.mrb[0].mxu0
    %746 = vmatprep.mubr.f32.mxu0 0.0
    %v747 = vand.u32 %v64, 4294901760
    %748 = vmatmul.mubr.f32.gmra.mrb[0].mxu0 %v747
    %v749 = vpop.f32.mrb[0].mxu0
    %v750 = vadd.f32 %v615, %v749
    %v751 = vpop.f32.mrb[0].mxu0
    %752 = vmatprep.mubr.f32.mxu0 0.0
    %v753 = vand.u32 %v67, 4294901760
    %754 = vmatmul.mubr.f32.gmra.mrb[0].mxu0 %v753
    %v755 = vpop.f32.mrb[0].mxu0
    %v756 = vadd.f32 %v623, %v755
    %v757 = vpop.f32.mrb[0].mxu0
    %758 = vmatprep.mubr.f32.mxu0 0.0
    %v759 = vand.u32 %v70, 4294901760
    %760 = vmatmul.mubr.f32.gmra.mrb[0].mxu0 %v759
    %v761 = vpop.f32.mrb[0].mxu0
    %v762 = vadd.f32 %v631, %v761
    %v763 = vpop.f32.mrb[0].mxu0
    %764 = vdwg.mxu0
    %765 = vmatprep.subr.mxu0 0.0
    %v766 = vand.u32 %v41, 4294901760
    %767 = vmatpush1.msra.mxu0 %v766
    %768 = vmatprep.subr.mxu0 0.0
    %v769 = vand.u32 %v42, 4294901760
    %770 = vmatpush1.msra.mxu0 %v769
    %771 = vmatprep.subr.mxu0 0.0
    %v772 = vand.u32 %v43, 4294901760
    %773 = vmatpush1.msra.mxu0 %v772
    %774 = vmatprep.subr.mxu0 0.0
    %v775 = vand.u32 %v44, 4294901760
    %776 = vmatpush1.msra.mxu0 %v775
    %777 = vmatprep.subr.mxu0 0.0
    %v778 = vand.u32 %v45, 4294901760
    %779 = vmatpush1.msra.mxu0 %v778
    %780 = vmatprep.subr.mxu0 0.0
    %v781 = vand.u32 %v46, 4294901760
    %782 = vmatpush1.msra.mxu0 %v781
    %783 = vmatprep.subr.mxu0 0.0
    %784 = vmatpush1.msra.mxu0 0.0
    %785 = vmatprep.subr.mxu0 0.0
    %786 = vmatpush1.msra.mxu0 0.0
    %787 = vmatprep.subr.mxu0 0.0
    %788 = vmatpush1.msra.mxu0 0.0
    %789 = vmatprep.subr.mxu0 0.0
    %790 = vmatpush1.msra.mxu0 0.0
    %791 = vmatprep.subr.mxu0 0.0
    %792 = vmatpush1.msra.mxu0 0.0
    %793 = vmatprep.subr.mxu0 0.0
    %794 = vmatpush1.msra.mxu0 0.0
    %795 = vmatprep.subr.mxu0 0.0
    %796 = vmatpush1.msra.mxu0 0.0
    %797 = vmatprep.subr.mxu0 0.0
    %798 = vmatpush1.msra.mxu0 0.0
    %799 = vmatprep.subr.mxu0 0.0
    %800 = vmatpush1.msra.mxu0 0.0
    %801 = vmatprep.subr.mxu0 0.0
    %802 = vmatpush1.msra.mxu0 0.0
    %803 = vmatprep.subr.mxu0 0.0
    %804 = vmatpush1.msra.mxu0 0.0
    %805 = vmatprep.subr.mxu0 0.0
    %806 = vmatpush1.msra.mxu0 0.0
    %807 = vmatprep.subr.mxu0 0.0
    %808 = vmatpush1.msra.mxu0 0.0
    %809 = vmatprep.subr.mxu0 0.0
    %810 = vmatpush1.msra.mxu0 0.0
    %811 = vmatprep.subr.mxu0 0.0
    %812 = vmatpush1.msra.mxu0 0.0
    %813 = vmatprep.subr.mxu0 0.0
    %814 = vmatpush1.msra.mxu0 0.0
    %815 = vmatprep.subr.mxu0 0.0
    %816 = vmatpush1.msra.mxu0 0.0
    %817 = vmatprep.subr.mxu0 0.0
    %818 = vmatpush1.msra.mxu0 0.0
    %819 = vmatprep.subr.mxu0 0.0
    %820 = vmatpush1.msra.mxu0 0.0
    %821 = vmatprep.subr.mxu0 0.0
    %822 = vmatpush1.msra.mxu0 0.0
    %823 = vmatprep.subr.mxu0 0.0
    %824 = vmatpush1.msra.mxu0 0.0
    %825 = vmatprep.subr.mxu0 0.0
    %826 = vmatpush1.msra.mxu0 0.0
    %827 = vmatprep.subr.mxu0 0.0
    %828 = vmatpush1.msra.mxu0 0.0
    %829 = vmatprep.subr.mxu0 0.0
    %830 = vmatpush1.msra.mxu0 0.0
    %831 = vmatprep.subr.mxu0 0.0
    %832 = vmatpush1.msra.mxu0 0.0
    %833 = vmatprep.subr.mxu0 0.0
    %834 = vmatpush1.msra.mxu0 0.0
    %835 = vmatprep.mubr.f32.mxu0 0.0
    %v836 = vand.u32 %v49, 4294901760
    %837 = vmatmul.mubr.f32.gmra.mrb[0].mxu0 %v836
    %v838 = vpop.f32.mrb[0].mxu0
    %v839 = vadd.f32 %v720, %v838
    %v840 = vpop.f32.mrb[0].mxu0
    %841 = vmatprep.mubr.f32.mxu0 0.0
    %v842 = vand.u32 %v52, 4294901760
    %843 = vmatmul.mubr.f32.gmra.mrb[0].mxu0 %v842
    %v844 = vpop.f32.mrb[0].mxu0
    %v845 = vadd.f32 %v726, %v844
    %v846 = vpop.f32.mrb[0].mxu0
    %847 = vmatprep.mubr.f32.mxu0 0.0
    %v848 = vand.u32 %v55, 4294901760
    %849 = vmatmul.mubr.f32.gmra.mrb[0].mxu0 %v848
    %v850 = vpop.f32.mrb[0].mxu0
    %v851 = vadd.f32 %v732, %v850
    %v852 = vpop.f32.mrb[0].mxu0
    %853 = vmatprep.mubr.f32.mxu0 0.0
    %v854 = vand.u32 %v58, 4294901760
    %855 = vmatmul.mubr.f32.gmra.mrb[0].mxu0 %v854
    %v856 = vpop.f32.mrb[0].mxu0
    %v857 = vadd.f32 %v738, %v856
    %v858 = vpop.f32.mrb[0].mxu0
    %859 = vmatprep.mubr.f32.mxu0 0.0
    %v860 = vand.u32 %v61, 4294901760
    %861 = vmatmul.mubr.f32.gmra.mrb[0].mxu0 %v860
    %v862 = vpop.f32.mrb[0].mxu0
    %v863 = vadd.f32 %v744, %v862
    %v864 = vpop.f32.mrb[0].mxu0
    %865 = vmatprep.mubr.f32.mxu0 0.0
    %v866 = vand.u32 %v64, 4294901760
    %867 = vmatmul.mubr.f32.gmra.mrb[0].mxu0 %v866
    %v868 = vpop.f32.mrb[0].mxu0
    %v869 = vadd.f32 %v750, %v868
    %v870 = vpop.f32.mrb[0].mxu0
    %871 = vmatprep.mubr.f32.mxu0 0.0
    %v872 = vand.u32 %v67, 4294901760
    %873 = vmatmul.mubr.f32.gmra.mrb[0].mxu0 %v872
    %v874 = vpop.f32.mrb[0].mxu0
    %v875 = vadd.f32 %v756, %v874
    %v876 = vpop.f32.mrb[0].mxu0
    %877 = vmatprep.mubr.f32.mxu0 0.0
    %v878 = vand.u32 %v70, 4294901760
    %879 = vmatmul.mubr.f32.gmra.mrb[0].mxu0 %v878
    %v880 = vpop.f32.mrb[0].mxu0
    %v881 = vadd.f32 %v762, %v880
    %v882 = vpop.f32.mrb[0].mxu0
    %883 = vdwg.mxu0
    %v884 = vadd.f32 %v25, %v839
    %v885 = vadd.f32 %v26, %v845
    %v886 = vadd.f32 %v27, %v851
    %v887 = vadd.f32 %v28, %v857
    %v888 = vadd.f32 %v29, %v863
    %v889 = vadd.f32 %v30, %v869
    %v890 = vadd.f32 %v31, %v875
    %v891 = vadd.f32 %v32, %v881
    %vm892 = vcmask 785408
    %893 = vst.msk [vmem:[#allocation2] sm:$0xff] %vm892, %v884
    %894 = vst.msk [vmem:[#allocation2 + $0x8] sm:$0xff] %vm892, %v885
    %895 = vst.msk [vmem:[#allocation2 + $0x10] sm:$0xff] %vm892, %v886
    %896 = vst.msk [vmem:[#allocation2 + $0x18] sm:$0xff] %vm892, %v887
    %897 = vst.msk [vmem:[#allocation2 + $0x20] sm:$0xff] %vm892, %v888
    %898 = vst.msk [vmem:[#allocation2 + $0x28] sm:$0xff] %vm892, %v889
    %899 = vst.msk [vmem:[#allocation2 + $0x30] sm:$0xff] %vm892, %v890
    %900 = vst.msk [vmem:[#allocation2 + $0x38] sm:$0xff] %vm892, %v891
    // Predicated region
    $region14: #{tpu_custom_call.1} parent=1 // pred_check
      _
    $region15: #{tpu_custom_call.1} parent=1 // pred_check_branch
      %902 = sbr.rel (0) target = $region17
    $region16: #{tpu_custom_call.1} parent=1 // pred_region
      %s904 = ssub.s32 1024, 1024
      %905 = vsyncadd [#allocation3], %s904
      %s906 = sshll.u32 [#allocation2], 4
      %s907 = int_to_ptr.vmem [resolvable:$true] %s906
      %912 = dma.vmem_to_hbm [thread:$0]  %s907, 1024, %s2, [#allocation3], 128, 128, 8
    $region17: #{tpu_custom_call.1} parent=1 // pred_fallthru
      _
    // Predicated region
    $region18: #{tpu_custom_call.1} parent=1 // pred_check
      _
    $region19: #{tpu_custom_call.1} parent=1 // pred_check_branch
      %914 = sbr.rel (0) target = $region21
    $region20: #{tpu_custom_call.1} parent=1 // pred_region
      %915 = dma.done [#allocation3], 1024
    $region21: #{tpu_custom_call.1} parent=1 // pred_fallthru
      _
    %916 = vsyncpa [#allocation3], 1

</llo_original>
